<compile_context>
chip_gen: v7x
topology: tpu7x:2x2x1
jax: 0.10.0
libtpu: 0.0.40
codegen_flags: <defaults>
</compile_context>

<pallas_src>
import functools

import jax
import jax.numpy as jnp
from jax import lax
from jax.experimental import pallas as pl
from jax.experimental.pallas import tpu as pltpu


# -----------------------------------------------------------------------------
# Pallas kernel: one (tq x N_pad) tile of
#   logits = prec @ score^T - debias ; history items (except label col) -> -1e4 ;
#   per-row cross entropy = logsumexp(logits) - logits[label].
# -----------------------------------------------------------------------------
def _logits_ce_kernel(prec_ref, score_t_ref, debias_ref, hist_ref, ce_ref,
                      *, seq, tq, n_pad):
    b = pl.program_id(0)       # batch index
    qt = pl.program_id(1)      # q-row tile index inside the batch

    # (tq, D) bf16 @ (D, N_pad) bf16 -> (tq, N_pad) f32 accumulator (MXU-native)
    logits = jnp.dot(prec_ref[0], score_t_ref[...],
                     preferred_element_type=jnp.float32)
    logits = logits - debias_ref[...]                      # (1, N_pad) f32 broadcast

    # label[b, s] = b*(seq+1) + s + 1  (== torch arange(bs*(seq+1)).reshape(..)[:,1:])
    row = lax.broadcasted_iota(jnp.int32, (tq, 1), 0)
    label_col = b * (seq + 1) + qt * tq + row + 1          # (tq, 1)
    col = lax.broadcasted_iota(jnp.int32, (tq, n_pad), 1)
    is_label = col == label_col                            # (tq, N_pad)

    # history items (and lane-padding columns) get -10000, except the label column
    masked = (hist_ref[0] != 0) & jnp.logical_not(is_label)
    logits = jnp.where(masked, -10000.0, logits)

    # per-row cross entropy, all in f32
    row_max = jnp.max(logits, axis=-1, keepdims=True)
    lse = row_max + jnp.log(jnp.sum(jnp.exp(logits - row_max),
                                    axis=-1, keepdims=True))
    lab_logit = jnp.sum(jnp.where(is_label, logits, 0.0), axis=-1, keepdims=True)
    ce_ref[0] = lse - lab_logit                            # (tq, 1)


def logits_cross_entropy(prec_vec, score_embs, debias, hist_mask_b, bs, seq):
    """Per-row CE, shape (bs, seq).  Invalid rows are NOT zeroed here (wrapper does)."""
    D = prec_vec.shape[-1]
    N = score_embs.shape[0]

    # row tile: 128 rows for long sequences, else the whole (8-aligned) sequence
    tq = 128 if seq >= 128 else ((seq + 7) // 8) * 8
    seq_pad = ((seq + tq - 1) // tq) * tq
    n_pad = ((N + 127) // 128) * 128

    # bf16 matmul operands (kernel accumulates in f32)
    prec = prec_vec.reshape(bs, seq, D)
    prec = jnp.pad(prec, ((0, 0), (0, seq_pad - seq), (0, 0))).astype(jnp.bfloat16)
    score_t = jnp.pad(score_embs.T, ((0, 0), (0, n_pad - N))).astype(jnp.bfloat16)

    debias_p = jnp.pad(debias.reshape(1, N).astype(jnp.float32),
                       ((0, 0), (0, n_pad - N)))
    # per-batch history mask (int8); padded candidate columns masked out (-> -1e4)
    hist = jnp.pad(hist_mask_b.astype(jnp.int8), ((0, 0), (0, n_pad - N)),
                   constant_values=1).reshape(bs, 1, n_pad)

    # rough VMEM budget: 2x-buffered streams + resident score/debias + f32 logits temps
    est = (4 * D * n_pad                      # 2x bf16 score (resident)
           + 8 * n_pad + 2 * n_pad            # debias + hist tiles
           + 4 * tq * D + 8 * tq              # prec tile + ce tile
           + 12 * tq * n_pad)                 # f32 logits / exp temporaries
    vmem_limit = int(min(max(2 * est, 16 * 1024 * 1024), 48 * 1024 * 1024))

    kernel = functools.partial(_logits_ce_kernel, seq=seq, tq=tq, n_pad=n_pad)
    ce = pl.pallas_call(
        kernel,
        out_shape=jax.ShapeDtypeStruct((bs, seq_pad, 1), jnp.float32),
        grid=(bs, seq_pad // tq),
        in_specs=[
            pl.BlockSpec((1, tq, D), lambda b, q: (b, q, 0)),      # prec row tile
            pl.BlockSpec((D, n_pad), lambda b, q: (0, 0)),         # score^T resident
            pl.BlockSpec((1, n_pad), lambda b, q: (0, 0)),         # debias resident
            pl.BlockSpec((1, 1, n_pad), lambda b, q: (b, 0, 0)),   # per-batch mask
        ],
        out_specs=pl.BlockSpec((1, tq, 1), lambda b, q: (b, q, 0)),
        compiler_params=pltpu.CompilerParams(
            dimension_semantics=("parallel", "parallel"),
            vmem_limit_bytes=vmem_limit),
    )(prec, score_t, debias_p, hist)
    return ce.reshape(bs, seq_pad)[:, :seq]


# -----------------------------------------------------------------------------
# Plain-JAX glue (parameter setup, user encoder, small reductions).
# -----------------------------------------------------------------------------
def _xavier(key, shape):
    fan_in, fan_out = shape[0], shape[1]
    std = jnp.sqrt(2.0 / (fan_in + fan_out))
    return std * jax.random.normal(key, shape, jnp.float32)


def _layer_norm(x, eps=1e-6):
    mu = jnp.mean(x, axis=-1, keepdims=True)
    var = jnp.var(x, axis=-1, keepdims=True)
    return (x - mu) / jnp.sqrt(var + eps)


def _l2norm(x, eps=1e-12):
    return x / jnp.maximum(jnp.linalg.norm(x, axis=-1, keepdims=True), eps)


def _batchnorm_train(x, eps=1e-5):
    # nn.BatchNorm1d in training mode, gamma=1 / beta=0 (default init)
    mu = jnp.mean(x, axis=0)
    var = jnp.var(x, axis=0)
    return (x - mu) / jnp.sqrt(var + eps)


def init_user_encoder(key, max_seq_len, d, n_layers):
    keys = jax.random.split(key, 1 + 6 * n_layers)
    p = {'pos': 0.02 * jax.random.normal(keys[0], (max_seq_len, d), jnp.float32),
         'layers': []}
    ki = 1
    for _ in range(n_layers):
        lp = {'wq': _xavier(keys[ki + 0], (d, d)),
              'wk': _xavier(keys[ki + 1], (d, d)),
              'wv': _xavier(keys[ki + 2], (d, d)),
              'wo': _xavier(keys[ki + 3], (d, d)),
              'w1': _xavier(keys[ki + 4], (d, 4 * d)),
              'b1': jnp.zeros((4 * d,), jnp.float32),
              'w2': _xavier(keys[ki + 5], (4 * d, d)),
              'b2': jnp.zeros((d,), jnp.float32)}
        ki += 6
        p['layers'].append(lp)
    return p


def user_encoder(p, x, log_mask, n_heads):
    # TODO(synk): the UserEncoder class is not defined in the provided source; this is
    # a standard SASRec-style transformer (pos-emb + causal/padding-masked MHSA + FFN),
    # eval-mode semantics (dropout omitted).
    bs, seq, d = x.shape
    dh = d // n_heads
    h = x + p['pos'][None, :seq, :]
    key_keep = (log_mask != 0)
    causal = jnp.tril(jnp.ones((seq, seq), dtype=bool))
    keep = causal[None, :, :] & key_keep[:, None, :]
    bias = jnp.where(keep, 0.0, -1e4).astype(jnp.float32)          # (bs, seq, seq)
    for lp in p['layers']:
        q = (h @ lp['wq']).reshape(bs, seq, n_heads, dh).transpose(0, 2, 1, 3)
        k = (h @ lp['wk']).reshape(bs, seq, n_heads, dh).transpose(0, 2, 1, 3)
        v = (h @ lp['wv']).reshape(bs, seq, n_heads, dh).transpose(0, 2, 1, 3)
        scores = jnp.einsum('bhqd,bhkd->bhqk', q, k) / jnp.sqrt(jnp.float32(dh))
        scores = scores + bias[:, None, :, :]
        attn = jax.nn.softmax(scores, axis=-1)
        ctx = jnp.einsum('bhqk,bhkd->bhqd', attn, v).transpose(0, 2, 1, 3).reshape(bs, seq, d)
        h = _layer_norm(h + ctx @ lp['wo'])
        ffn = jax.nn.gelu(h @ lp['w1'] + lp['b1']) @ lp['w2'] + lp['b2']
        h = _layer_norm(h + ffn)
    return h


def alignment(x, y):
    x, y = _l2norm(x), _l2norm(y)
    return jnp.mean(jnp.sum((x - y) ** 2, axis=1))


def uniformity(x):
    x = _l2norm(x)
    d2 = jnp.sum((x[:, None, :] - x[None, :, :]) ** 2, axis=-1)
    iu = jnp.triu_indices(x.shape[0], k=1)
    vals = d2[iu]                                   # torch.pdist(x)^2
    return jnp.log(jnp.mean(jnp.exp(-2.0 * vals)))


def forward(params, sample_items_id, log_mask, n_heads):
    bs, seq = log_mask.shape
    N = sample_items_id.shape[0]                    # bs * (seq + 1)
    D = params['id_emb'].shape[1]

    debias_logits = jnp.log(params['pop_prob'][sample_items_id])          # (N,)
    score_embs = params['id_emb'][sample_items_id]                        # (N, D)
    input_embs = score_embs.reshape(bs, seq + 1, D)

    prec_vec = user_encoder(params['ue'], input_embs[:, :-1, :], log_mask, n_heads)
    prec_vec = prec_vec.reshape(bs * seq, D)

    # per-batch history mask (torch: user_history = [items_of_batch, 0]; any over pos)
    items_bsq = sample_items_id.reshape(bs, seq + 1)
    hist_mask_b = (jnp.any(items_bsq[:, :, None] == sample_items_id[None, None, :],
                           axis=1)
                   | (sample_items_id[None, :] == 0))                     # (bs, N)

    ce = logits_cross_entropy(prec_vec, score_embs, debias_logits,
                              hist_mask_b, bs, seq)                       # (bs, seq)
    valid = (log_mask != 0).astype(jnp.float32)
    loss = jnp.sum(ce * valid) / jnp.sum(valid)

    # alignment / uniformity (pre-batchnorm prec_vec, as in torch)
    user = prec_vec.reshape(bs, seq, D)[:, -1, :]
    item = score_embs.reshape(bs, seq + 1, D)[:, -1, :]
    align = alignment(user, item)
    uniform = (uniformity(user) + uniformity(item)) / 2.0

    # BatchNorm (training-mode batch stats) + L2-normalize
    input_bn = _batchnorm_train(score_embs)                               # (N, D)
    input_n = _l2norm(input_bn.reshape(bs, seq + 1, D))
    prec_bn = _batchnorm_train(prec_vec)                                  # (bs*seq, D)
    hist_embs = _l2norm(prec_bn.reshape(bs, seq, D))
    targets_embs = input_n[:, -1, :]                                      # (bs, D)

    # per-user "never seen" mask and nxn cosine similarity (vectorised loop)
    not_in_seq = jnp.all(items_bsq[:, :, None] != sample_items_id[None, None, :],
                         axis=1)                                          # (bs, N)
    input_flat = input_n.reshape(-1, D)                                   # (N, D)
    numerator = targets_embs @ input_flat.T                               # (bs, N)
    a_l2 = jnp.sum(targets_embs * targets_embs, axis=1)
    b_l2 = jnp.sum(input_flat * input_flat, axis=1)
    denom = jnp.maximum(jnp.sqrt(jnp.outer(a_l2, b_l2)), 1e-8)
    sim = numerator / denom
    sim = jnp.where(not_in_seq, sim, -jnp.inf)        # restrict argmax to allowed items
    closest_idx = jnp.argmax(sim, axis=1)                                 # (bs,)
    closest = input_flat[closest_idx]                                     # (bs, D)
    mi_per_user = jnp.mean(jnp.linalg.norm(hist_embs - closest[:, None, :], axis=-1),
                           axis=1)
    mi_loss = jnp.sum(mi_per_user)

    alpha = 5e-05
    return loss + alpha * mi_loss, align, uniform


# -----------------------------------------------------------------------------
if __name__ == "__main__":
    key = jax.random.PRNGKey(0)
    k_emb, k_pop, k_ue, k_items = jax.random.split(key, 4)

    D = 32            # args.embedding_dim
    item_num = 50
    max_seq_len = 8   # args.max_seq_len
    bs = 2
    n_heads = 2       # args.num_attention_heads
    n_layers = 1      # args.transformer_block

    params = {
        # nn.Embedding(item_num+1, D) + xavier_normal_ (overwrites padding row too)
        'id_emb': jnp.sqrt(2.0 / (item_num + 1 + D))
                  * jax.random.normal(k_emb, (item_num + 1, D), jnp.float32),
        'pop_prob': jax.random.uniform(k_pop, (item_num + 1,), jnp.float32,
                                       minval=0.05, maxval=1.0),
        'ue': init_user_encoder(k_ue, max_seq_len, D, n_layers),
    }

    sample_items_id = jax.random.randint(
        k_items, (bs * (max_seq_len + 1),), 1, item_num + 1, dtype=jnp.int32)
    log_mask = jnp.ones((bs, max_seq_len), jnp.int32).at[0, :2].set(0)

    loss, align, uniform = forward(params, sample_items_id, log_mask, n_heads)
    jax.block_until_ready((loss, align, uniform))
    assert jnp.isfinite(loss) and jnp.isfinite(align) and jnp.isfinite(uniform)
    print("KERNEL_OK")
</pallas_src>

<mosaic_0001>
module attributes {stable_mosaic.version = 11 : i64} {
  func.func @_logits_ce_kernel(%arg0: i32, %arg1: i32, %arg2: memref<1x8x32xbf16, #tpu.memory_space<vmem>>, %arg3: memref<32x128xbf16, #tpu.memory_space<vmem>>, %arg4: memref<1x128xf32, #tpu.memory_space<vmem>>, %arg5: memref<1x1x128xi8, #tpu.memory_space<vmem>>, %arg6: memref<1x8x1xf32, #tpu.memory_space<vmem>>) attributes {dimension_semantics = [#tpu.dimension_semantics<parallel>, #tpu.dimension_semantics<parallel>], iteration_bounds = array<i64: 2, 1>, scalar_prefetch = 0 : i64, scratch_operands = 0 : i64, tpu.core_type = #tpu.core_type<tc>, window_params = [{transform_indices = @transform_0, window_bounds = array<i64: 1, 8, 32>}, {pipeline_mode = #tpu.pipeline_mode<synchronous>, transform_indices = @transform_1, window_bounds = array<i64: 32, 128>}, {pipeline_mode = #tpu.pipeline_mode<synchronous>, transform_indices = @transform_2, window_bounds = array<i64: 1, 128>}, {transform_indices = @transform_3, window_bounds = array<i64: 1, 1, 128>}, {transform_indices = @transform_4, window_bounds = array<i64: 1, 8, 1>}]} {
    %c0 = arith.constant 0 : index
    %c0_0 = arith.constant 0 : index
    %c0_1 = arith.constant 0 : index
    %0 = vector.load %arg2[%c0, %c0_0, %c0_1] : memref<1x8x32xbf16, #tpu.memory_space<vmem>>, vector<1x8x32xbf16>
    %1 = vector.shape_cast %0 : vector<1x8x32xbf16> to vector<8x32xbf16>
    %c0_2 = arith.constant 0 : index
    %c0_3 = arith.constant 0 : index
    %2 = vector.load %arg3[%c0_2, %c0_3] : memref<32x128xbf16, #tpu.memory_space<vmem>>, vector<32x128xbf16>
    %cst = arith.constant dense<0.000000e+00> : vector<8x128xf32>
    %3 = tpu.matmul %1, %2, %cst {dimension_numbers = #tpu.dot_dimension_numbers<[1], [0], [0], [1], [0, 0, 1, 1], [], []>} : vector<8x32xbf16>, vector<32x128xbf16>, vector<8x128xf32> -> vector<8x128xf32>
    %c0_4 = arith.constant 0 : index
    %c0_5 = arith.constant 0 : index
    %4 = vector.load %arg4[%c0_4, %c0_5] : memref<1x128xf32, #tpu.memory_space<vmem>>, vector<1x128xf32>
    %5 = vector.broadcast %4 : vector<1x128xf32> to vector<8x128xf32>
    %6 = arith.subf %3, %5 : vector<8x128xf32>
    %7 = tpu.iota {dimensions = array<i32: 0>} : vector<8x1xi32>
    %c9_i32 = arith.constant 9 : i32
    %8 = arith.muli %arg0, %c9_i32 : i32
    %c8_i32 = arith.constant 8 : i32
    %9 = arith.muli %arg1, %c8_i32 : i32
    %10 = arith.addi %8, %9 : i32
    %11 = vector.broadcast %10 : i32 to vector<8x1xi32>
    %12 = arith.addi %11, %7 : vector<8x1xi32>
    %c1_i32 = arith.constant 1 : i32
    %13 = vector.broadcast %c1_i32 : i32 to vector<8x1xi32>
    %14 = arith.addi %12, %13 : vector<8x1xi32>
    %15 = tpu.iota {dimensions = array<i32: 1>} : vector<8x128xi32>
    %16 = vector.broadcast %14 : vector<8x1xi32> to vector<8x128xi32>
    %17 = arith.cmpi eq, %15, %16 : vector<8x128xi32>
    %c0_6 = arith.constant 0 : index
    %c0_7 = arith.constant 0 : index
    %c0_8 = arith.constant 0 : index
    %18 = vector.load %arg5[%c0_6, %c0_7, %c0_8] : memref<1x1x128xi8, #tpu.memory_space<vmem>>, vector<1x1x128xi8>
    %19 = vector.shape_cast %18 : vector<1x1x128xi8> to vector<1x128xi8>
    %c0_i8 = arith.constant 0 : i8
    %20 = vector.broadcast %c0_i8 : i8 to vector<1x128xi8>
    %21 = arith.cmpi ne, %19, %20 : vector<1x128xi8>
    %cst_9 = arith.constant dense<true> : vector<8x128xi1>
    %22 = arith.xori %17, %cst_9 : vector<8x128xi1>
    %23 = vector.broadcast %21 : vector<1x128xi1> to vector<8x128xi1>
    %24 = arith.andi %23, %22 : vector<8x128xi1>
    %cst_10 = arith.constant -1.000000e+04 : f32
    %25 = vector.broadcast %cst_10 : f32 to vector<8x128xf32>
    %26 = arith.select %24, %25, %6 : vector<8x128xi1>, vector<8x128xf32>
    %cst_11 = arith.constant dense<0xFF800000> : vector<8xf32>
    %27 = vector.multi_reduction <maximumf>, %26, %cst_11 [1] : vector<8x128xf32> to vector<8xf32>
    %28 = vector.shape_cast %27 : vector<8xf32> to vector<8x1xf32>
    %29 = vector.broadcast %28 : vector<8x1xf32> to vector<8x128xf32>
    %30 = arith.subf %26, %29 : vector<8x128xf32>
    %31 = math.exp %30 : vector<8x128xf32>
    %cst_12 = arith.constant dense<0.000000e+00> : vector<8xf32>
    %32 = vector.multi_reduction <add>, %31, %cst_12 [1] : vector<8x128xf32> to vector<8xf32>
    %33 = vector.shape_cast %32 : vector<8xf32> to vector<8x1xf32>
    %34 = math.log %33 : vector<8x1xf32>
    %35 = arith.addf %28, %34 : vector<8x1xf32>
    %cst_13 = arith.constant 0.000000e+00 : f32
    %36 = vector.broadcast %cst_13 : f32 to vector<8x128xf32>
    %37 = arith.select %17, %26, %36 : vector<8x128xi1>, vector<8x128xf32>
    %cst_14 = arith.constant dense<0.000000e+00> : vector<8xf32>
    %38 = vector.multi_reduction <add>, %37, %cst_14 [1] : vector<8x128xf32> to vector<8xf32>
    %39 = vector.shape_cast %38 : vector<8xf32> to vector<8x1xf32>
    %40 = arith.subf %35, %39 : vector<8x1xf32>
    %c0_15 = arith.constant 0 : index
    %c0_16 = arith.constant 0 : index
    %c0_17 = arith.constant 0 : index
    %41 = vector.load %arg6[%c0_15, %c0_16, %c0_17] : memref<1x8x1xf32, #tpu.memory_space<vmem>>, vector<1x8x1xf32>
    %42 = vector.shape_cast %41 : vector<1x8x1xf32> to vector<8x1xf32>
    %43 = vector.shape_cast %40 : vector<8x1xf32> to vector<1x8x1xf32>
    tpu.vector_store %arg6[%c0_15, %c0_16, %c0_17], %43 {strides = array<i32>} : memref<1x8x1xf32, #tpu.memory_space<vmem>>, vector<1x8x1xf32>,
    return
  }
  func.func @transform_0(%arg0: i32, %arg1: i32) -> (i32, i32, i32) {
    %c0_i32 = arith.constant 0 : i32
    %c0_i32_0 = arith.constant 0 : i32
    return %arg0, %arg1, %c0_i32 : i32, i32, i32
  }
  func.func @transform_1(%arg0: i32, %arg1: i32) -> (i32, i32) {
    %c0_i32 = arith.constant 0 : i32
    %c0_i32_0 = arith.constant 0 : i32
    %c0_i32_1 = arith.constant 0 : i32
    return %c0_i32, %c0_i32_0 : i32, i32
  }
  func.func @transform_2(%arg0: i32, %arg1: i32) -> (i32, i32) {
    %c0_i32 = arith.constant 0 : i32
    %c0_i32_0 = arith.constant 0 : i32
    %c0_i32_1 = arith.constant 0 : i32
    return %c0_i32, %c0_i32_0 : i32, i32
  }
  func.func @transform_3(%arg0: i32, %arg1: i32) -> (i32, i32, i32) {
    %c0_i32 = arith.constant 0 : i32
    %c0_i32_0 = arith.constant 0 : i32
    %c0_i32_1 = arith.constant 0 : i32
    return %arg0, %c0_i32, %c0_i32_0 : i32, i32, i32
  }
  func.func @transform_4(%arg0: i32, %arg1: i32) -> (i32, i32, i32) {
    %c0_i32 = arith.constant 0 : i32
    %c0_i32_0 = arith.constant 0 : i32
    return %arg0, %arg1, %c0_i32 : i32, i32, i32
  }
}

</mosaic_0001>

<llo_original>
// kernel: tpu_custom_call.1
$region0: #{tpu_custom_call.1}
  #allocation0 [shape = 'u32[]', space=smem, size = 0x4, offset = 0x4, fixed_abs, tag = 'smem constant byte address 0x4 - core index']
  #allocation1 [shape = 'u32[144,128]{1,0:T(1,128)}', space=vmem, size = 0x12000, scoped, tag = 'internal scratch']
  %s0 = inlined_call_operand.hbm [shape: bf16[2,8,32], index: 0, kind: input, shape index: {}]
  %s1 = inlined_call_operand.hbm [shape: bf16[32,128], index: 1, kind: input, shape index: {}]
  %s2 = inlined_call_operand.vmem [shape: f32[1,128], index: 2, kind: input, shape index: {}]
  %s3 = inlined_call_operand.vmem [shape: s8[2,1,128], index: 3, kind: input, shape index: {}]
  %s4 = inlined_call_operand.vmem [shape: f32[2,8,1], index: 4, kind: output, shape index: {}]
  %s5 = sld [smem:[#allocation0]]
  $region57: #{tpu_custom_call.1} parent=0
    _
  %s7 = ssub.s32 1, %s5
  %s8 = scalar_select 0, %s7, %s5
  $region1: #{tpu_custom_call.1} parent=0
    #allocation2 [shape = 'u8[4096]{0}', space=vmem, size = 0x1000, scoped, tag = 'input window, operand 0']
    #allocation3 [shape = 's32[2]{0}', space=sflag, size = 0x8, scoped, tag = 'scoped memory for tpu_custom_call.1']
    #allocation4 [shape = 'u8[8192]{0}', space=vmem, size = 0x2000, scoped, tag = 'input window, operand 1, single buffered']
    #allocation5 [shape = 's32[1]{0}', space=sflag, size = 0x4, scoped, tag = 'scoped memory for tpu_custom_call.1']
    %9 = vsyncpa [#allocation3], 0
    %s10 = scalar_lea.sflag [#allocation3], 1
    %11 = vsyncpa %s10, 0
    %12 = vsyncpa [#allocation5], 0
    loop: start=0, step=1, limit=4
    $region2: #{tpu_custom_call.1} parent=1 // loop_pre_header
      _
    $region3: #{tpu_custom_call.1} parent=1 // loop_header
      %s14 = sphi 0, %s18
      %p15 = scmp.ge.s32.totalorder %s14, 4
      %s21 = sphi 0, %s33
      %s22 = sphi 0, %s29
      %s23 = sphi 0, %s21
      %s24 = sphi 0, %s22
      %s25 = sphi 0, %s23
      %s26 = sphi 0, %s24
      %s38 = sphi 0, %s40
      %s41 = sphi 0, %s38
      %s42 = sphi 0, %s41
      %s58 = sphi 0, %s42
      %s62 = sphi 0, %s62
      %s64 = sphi 0, %s62
      %s65 = sphi 0, %s64
      %s79 = sphi 0, %s65
      %s83 = sphi 0, %s83
      %s85 = sphi 0, %s83
      %s86 = sphi 0, %s85
      %s100 = sphi 0, %s86
      %s106 = sphi 0, %s108
      %s109 = sphi 0, %s106
      %s110 = sphi 0, %s109
      %s126 = sphi 0, %s110
      %s134 = sphi 0, %s136
      %s137 = sphi 0, %s134
      %s138 = sphi 0, %s137
      %s154 = sphi 0, %s138
    $region4: #{tpu_custom_call.1} parent=1 // loop_header_branch
      %17 = sbr.rel (%p15) target = $region8
    $region5: #{tpu_custom_call.1} parent=1 // loop_body
      %s19 = ssub.s32 %s14, 1
      %s20 = ssub.s32 %s14, 2
      %s27 = sadd.s32 1, %s22
      %p28 = scmp.ge.s32.totalorder %s27, 1
      %s29 = scalar_select %p28, 0, %s27
      %s30 = sadd.s32 1, %s21
      %s31 = scalar_select %p28, %s30, %s21
      %p32 = scmp.ge.s32.totalorder %s31, 2
      %s33 = scalar_select %p32, 0, %s31
      %s34 = ssub.s32 %s21, %s33
      %s35 = ssub.s32 %s22, %s29
      %s36 = sor.u32 %s34, %s35
      %p37 = scmp.eq.s32.totalorder %s36, 0
      %s39 = sadd.s32 %s38, 1
      %s40 = scalar_select %p37, %s38, %s39
      %p43 = pneg %p37
      %p44 = scmp.eq.s32.totalorder %s14, 1
      %p45 = por %p43, %p44
      %p46 = scmp.ne.s32.totalorder %s38, %s41
      %p47 = scmp.eq.s32.totalorder %s14, 0
      %p48 = por %p46, %p47
      %p49 = scmp.ne.s32.totalorder %s38, %s41
      %p50 = scmp.eq.s32.totalorder %s19, 1
      %p51 = por %p49, %p50
      %p52 = scmp.ne.s32.totalorder %s41, %s42
      %p53 = scmp.eq.s32.totalorder %s19, 0
      %p54 = por %p52, %p53
      %p55 = scmp.ne.s32.totalorder %s41, %s42
      %p56 = scmp.eq.s32.totalorder %s20, 1
      %p57 = por %p55, %p56
      %p59 = scmp.ne.s32.totalorder %s42, %s58
      %p60 = scmp.eq.s32.totalorder %s20, 0
      %p61 = por %p59, %p60
      %s63 = sadd.s32 %s62, 1
      %p66 = scmp.eq.s32.totalorder %s14, 1
      %p67 = scmp.ne.s32.totalorder %s62, %s64
      %p68 = scmp.eq.s32.totalorder %s14, 0
      %p69 = por %p67, %p68
      %p70 = scmp.ne.s32.totalorder %s62, %s64
      %p71 = scmp.eq.s32.totalorder %s19, 1
      %p72 = por %p70, %p71
      %p73 = scmp.ne.s32.totalorder %s64, %s65
      %p74 = scmp.eq.s32.totalorder %s19, 0
      %p75 = por %p73, %p74
      %p76 = scmp.ne.s32.totalorder %s64, %s65
      %p77 = scmp.eq.s32.totalorder %s20, 1
      %p78 = por %p76, %p77
      %p80 = scmp.ne.s32.totalorder %s65, %s79
      %p81 = scmp.eq.s32.totalorder %s20, 0
      %p82 = por %p80, %p81
      %s84 = sadd.s32 %s83, 1
      %p87 = scmp.eq.s32.totalorder %s14, 1
      %p88 = scmp.ne.s32.totalorder %s83, %s85
      %p89 = scmp.eq.s32.totalorder %s14, 0
      %p90 = por %p88, %p89
      %p91 = scmp.ne.s32.totalorder %s83, %s85
      %p92 = scmp.eq.s32.totalorder %s19, 1
      %p93 = por %p91, %p92
      %p94 = scmp.ne.s32.totalorder %s85, %s86
      %p95 = scmp.eq.s32.totalorder %s19, 0
      %p96 = por %p94, %p95
      %p97 = scmp.ne.s32.totalorder %s85, %s86
      %p98 = scmp.eq.s32.totalorder %s20, 1
      %p99 = por %p97, %p98
      %p101 = scmp.ne.s32.totalorder %s86, %s100
      %p102 = scmp.eq.s32.totalorder %s20, 0
      %p103 = por %p101, %p102
      %s104 = ssub.s32 %s21, %s33
      %p105 = scmp.eq.s32.totalorder %s104, 0
      %s107 = sadd.s32 %s106, 1
      %s108 = scalar_select %p105, %s106, %s107
      %p111 = pneg %p105
      %p112 = scmp.eq.s32.totalorder %s14, 1
      %p113 = por %p111, %p112
      %p114 = scmp.ne.s32.totalorder %s106, %s109
      %p115 = scmp.eq.s32.totalorder %s14, 0
      %p116 = por %p114, %p115
      %p117 = scmp.ne.s32.totalorder %s106, %s109
      %p118 = scmp.eq.s32.totalorder %s19, 1
      %p119 = por %p117, %p118
      %p120 = scmp.ne.s32.totalorder %s109, %s110
      %p121 = scmp.eq.s32.totalorder %s19, 0
      %p122 = por %p120, %p121
      %p123 = scmp.ne.s32.totalorder %s109, %s110
      %p124 = scmp.eq.s32.totalorder %s20, 1
      %p125 = por %p123, %p124
      %p127 = scmp.ne.s32.totalorder %s110, %s126
      %p128 = scmp.eq.s32.totalorder %s20, 0
      %p129 = por %p127, %p128
      %s130 = ssub.s32 %s21, %s33
      %s131 = ssub.s32 %s22, %s29
      %s132 = sor.u32 %s130, %s131
      %p133 = scmp.eq.s32.totalorder %s132, 0
      %s135 = sadd.s32 %s134, 1
      %s136 = scalar_select %p133, %s134, %s135
      %p139 = pneg %p133
      %p140 = scmp.eq.s32.totalorder %s14, 1
      %p141 = por %p139, %p140
      %p142 = scmp.ne.s32.totalorder %s134, %s137
      %p143 = scmp.eq.s32.totalorder %s14, 0
      %p144 = por %p142, %p143
      %p145 = scmp.ne.s32.totalorder %s134, %s137
      %p146 = scmp.eq.s32.totalorder %s19, 1
      %p147 = por %p145, %p146
      %p148 = scmp.ne.s32.totalorder %s137, %s138
      %p149 = scmp.eq.s32.totalorder %s19, 0
      %p150 = por %p148, %p149
      %p151 = scmp.ne.s32.totalorder %s137, %s138
      %p152 = scmp.eq.s32.totalorder %s20, 1
      %p153 = por %p151, %p152
      %p155 = scmp.ne.s32.totalorder %s138, %s154
      %p156 = scmp.eq.s32.totalorder %s20, 0
      %p157 = por %p155, %p156
      %p158 = scmp.le.s32.totalorder 1, %s14
      %p159 = scmp.lt.s32.totalorder %s14, 3
      %p160 = pnand %p158, %p159
      %p161 = pneg %p160
      // Predicated region
      $region9: #{tpu_custom_call.1} parent=5 // pred_check
        _
      $region10: #{tpu_custom_call.1} parent=5 // pred_check_branch
        %163 = sbr.rel (%p160) target = $region12
      $region11: #{tpu_custom_call.1} parent=5 // pred_region
        %s164 = ssub.s32 %s14, 1
        // Predicated region
        $region13: #{tpu_custom_call.1} parent=11 // pred_check
          %p165 = pneg %p75
        $region14: #{tpu_custom_call.1} parent=11 // pred_check_branch
          %167 = sbr.rel (%p165) target = $region16
        $region15: #{tpu_custom_call.1} parent=11 // pred_region
          %s169 = ssub.s32 256, 256
          %170 = vsyncadd [#allocation5], %s169
          %s171 = sshll.u32 [#allocation4], 4
          %s172 = int_to_ptr.vmem [resolvable:$true] %s171
          %177 = dma.hbm_to_vmem [thread:$0]  %s1, 256, %s172, [#allocation5], 64, 64, 4
        $region16: #{tpu_custom_call.1} parent=11 // pred_fallthru
          _
        // Predicated region
        $region17: #{tpu_custom_call.1} parent=11 // pred_check
          %p178 = pneg %p96
        $region18: #{tpu_custom_call.1} parent=11 // pred_check_branch
          %180 = sbr.rel (%p178) target = $region20
        $region19: #{tpu_custom_call.1} parent=11 // pred_region
          _
        $region20: #{tpu_custom_call.1} parent=11 // pred_fallthru
          _
      $region12: #{tpu_custom_call.1} parent=5 // pred_fallthru
        _
      %p181 = scmp.lt.s32.totalorder %s14, 2
      // Predicated region
      $region21: #{tpu_custom_call.1} parent=5 // pred_check
        %p182 = pneg %p181
      $region22: #{tpu_custom_call.1} parent=5 // pred_check_branch
        %184 = sbr.rel (%p182) target = $region24
      $region23: #{tpu_custom_call.1} parent=5 // pred_region
        // Predicated region
        $region25: #{tpu_custom_call.1} parent=23 // pred_check
          %p185 = pneg %p48
        $region26: #{tpu_custom_call.1} parent=23 // pred_check_branch
          %187 = sbr.rel (%p185) target = $region28
        $region27: #{tpu_custom_call.1} parent=23 // pred_region
          %s188 = sand.u32 %s38, 1
          %s189 = scalar_lea.sflag [#allocation3], %s188
          %s190 = sand.u32 %s38, 1
          %s191 = smul.addr %s190, 4
          %s192 = scalar_lea.vmem [#allocation2], %s191
          %s194 = ssub.s32 64, 64
          %195 = vsyncadd %s189, %s194
          %s196 = sadd.s32 %s22, %s21
          %s197 = smul.addr %s196, 64
          %s198 = scalar_lea.hbm %s0, %s197
          %s200 = sshll.u32 %s192, 4
          %s201 = int_to_ptr.vmem [resolvable:$true] %s200
          %203 = dma.hbm_to_vmem [thread:$0]  %s198, 64, %s201, %s189
        $region28: #{tpu_custom_call.1} parent=23 // pred_fallthru
          _
        // Predicated region
        $region29: #{tpu_custom_call.1} parent=23 // pred_check
          %p204 = pneg %p116
        $region30: #{tpu_custom_call.1} parent=23 // pred_check_branch
          %206 = sbr.rel (%p204) target = $region32
        $region31: #{tpu_custom_call.1} parent=23 // pred_region
          %p207 = scmp.lt.s32.totalorder %s21, 1
          %s208 = scalar_select %p207, %s21, 1
          %s209 = scalar_lea.vmem %s3, %s208
        $region32: #{tpu_custom_call.1} parent=23 // pred_fallthru
          _
      $region24: #{tpu_custom_call.1} parent=5 // pred_fallthru
        _
      %p210 = scmp.le.s32.totalorder 1, %s14
      %p211 = scmp.lt.s32.totalorder %s14, 3
      %p212 = pnand %p210, %p211
      %p213 = pneg %p212
      // Predicated region
      $region33: #{tpu_custom_call.1} parent=5 // pred_check
        _
      $region34: #{tpu_custom_call.1} parent=5 // pred_check_branch
        %215 = sbr.rel (%p212) target = $region36
      $region35: #{tpu_custom_call.1} parent=5 // pred_region
        %s216 = ssub.s32 %s14, 1
        %s217 = sand.u32 %s41, 1
        %s218 = scalar_lea.sflag [#allocation3], %s217
        %s219 = sand.u32 %s41, 1
        %s220 = smul.addr %s219, 4
        %s221 = scalar_lea.vmem [#allocation2], %s220
        // Predicated region
        $region37: #{tpu_custom_call.1} parent=35 // pred_check
          %p222 = pneg %p54
        $region38: #{tpu_custom_call.1} parent=35 // pred_check_branch
          %224 = sbr.rel (%p222) target = $region40
        $region39: #{tpu_custom_call.1} parent=35 // pred_region
          %225 = dma.done %s218, 64
        $region40: #{tpu_custom_call.1} parent=35 // pred_fallthru
          _
        // Predicated region
        $region41: #{tpu_custom_call.1} parent=35 // pred_check
          %p226 = pneg %p75
        $region42: #{tpu_custom_call.1} parent=35 // pred_check_branch
          %228 = sbr.rel (%p226) target = $region44
        $region43: #{tpu_custom_call.1} parent=35 // pred_region
          %229 = dma.done [#allocation5], 256
        $region44: #{tpu_custom_call.1} parent=35 // pred_fallthru
          _
        %s230 = sand.u32 %s41, 1
        %s231 = scalar_lea.sflag [#allocation3], %s230
        %s232 = sand.u32 %s41, 1
        %s233 = smul.addr %s232, 4
        %s234 = scalar_lea.vmem [#allocation2], %s233
        %p235 = pneg %p54
        %p236 = pneg %p51
        %p237 = pneg %p75
        %p238 = pneg %p72
        %p239 = pneg %p96
        %p240 = pneg %p93
        %p241 = scmp.lt.s32.totalorder %s23, 1
        %s242 = scalar_select %p241, %s23, 1
        %s243 = scalar_lea.vmem %s3, %s242
        %p244 = pneg %p122
        %p245 = pneg %p119
        %p246 = pneg %p150
        %p247 = pneg %p147
        %p248 = scmp.lt.s32.totalorder %s23, 1
        %s249 = scalar_select %p248, %s23, 1
        %p250 = scmp.lt.s32.totalorder %s24, 0
        %s251 = scalar_select %p250, %s24, 0
        %s252 = sadd.s32 %s251, %s249
        %s253 = smul.addr %s252, 8
        %s254 = scalar_lea.vmem %s4, %s253
        %p255 = scmp.lt.s32.totalorder %s23, 1
        %s256 = scalar_select %p255, %s23, 1
        %s257 = scalar_lea.vmem %s3, %s256
        %p258 = scmp.lt.s32.totalorder %s23, 1
        %s259 = scalar_select %p258, %s23, 1
        %p260 = scmp.lt.s32.totalorder %s24, 0
        %s261 = scalar_select %p260, %s24, 0
        %s262 = sadd.s32 %s261, %s259
        %s263 = smul.addr %s262, 8
        %s264 = scalar_lea.vmem %s4, %s263
        %v268 = vld [vmem:[%s221] sm:$0xf]
        %v269 = vld [vmem:[#allocation4] sm:$0xf]
        %v270 = vld [vmem:[#allocation4 + $0x4] sm:$0xf]
        %v271 = vld [vmem:[#allocation4 + $0x8] sm:$0xf]
        %v272 = vld [vmem:[#allocation4 + $0xc] sm:$0xf]
        %v277 = vunpack.c.l.b16 %v269
        %v278 = vunpack.c.l.b16 %v270
        %v279 = vunpack.c.l.b16 %v271
        %v280 = vunpack.c.l.b16 %v272
        %v281 = vpack.c.b16 %v278, %v277
        %v282 = vpack.c.b16 %v280, %v279
        %vm285 = vcmask 261120
        %v287 = vsel %vm285, %v268, 0
        %289 = vmatprep.subr.bf16.mxu0 0
        %290 = vmatpush1.bf16.msra.mxu0 %v281
        %291 = vmatprep.subr.bf16.mxu0 0
        %292 = vmatpush1.bf16.msra.mxu0 %v282
        %293 = vmatprep.subr.bf16.mxu0 0
        %294 = vmatpush1.bf16.msra.mxu0 0
        %295 = vmatprep.subr.bf16.mxu0 0
        %296 = vmatpush1.bf16.msra.mxu0 0
        %297 = vmatprep.subr.bf16.mxu0 0
        %298 = vmatpush1.bf16.msra.mxu0 0
        %299 = vmatprep.subr.bf16.mxu0 0
        %300 = vmatpush1.bf16.msra.mxu0 0
        %301 = vmatprep.subr.bf16.mxu0 0
        %302 = vmatpush1.bf16.msra.mxu0 0
        %303 = vmatprep.subr.bf16.mxu0 0
        %304 = vmatpush1.bf16.msra.mxu0 0
        %305 = vmatprep.subr.bf16.mxu0 0
        %306 = vmatpush1.bf16.msra.mxu0 0
        %307 = vmatprep.subr.bf16.mxu0 0
        %308 = vmatpush1.bf16.msra.mxu0 0
        %309 = vmatprep.subr.bf16.mxu0 0
        %310 = vmatpush1.bf16.msra.mxu0 0
        %311 = vmatprep.subr.bf16.mxu0 0
        %312 = vmatpush1.bf16.msra.mxu0 0
        %313 = vmatprep.subr.bf16.mxu0 0
        %314 = vmatpush1.bf16.msra.mxu0 0
        %315 = vmatprep.subr.bf16.mxu0 0
        %316 = vmatpush1.bf16.msra.mxu0 0
        %317 = vmatprep.subr.bf16.mxu0 0
        %318 = vmatpush1.bf16.msra.mxu0 0
        %319 = vmatprep.subr.bf16.mxu0 0
        %320 = vmatpush1.bf16.msra.mxu0 0
        %321 = vmatprep.mubr.bf16.mxu0 0
        %322 = vmatmul.mubr.bf16.gmra.mrb[0].mxu0 %v287
        %v323 = vpop.f32.mrb[0].mxu0
        %v324 = vadd.f32 0.0, %v323
        %v325 = vpop.f32.mrb[0].mxu0
        %v326 = vpop.f32.mrb[0].mxu0
        %v327 = vpop.f32.mrb[0].mxu0
        %328 = vdwg.mxu0
        %v329 = vld [vmem:[%s2] sm:$0x1]
        %v331 = vlaneseq
        %v332 = vshrl.u32 %v331, 7
        %v333 = vsub.s32 0, %v332
        %v334 = vrot.slane %v329, %v333
        %v336 = vsub.f32 %v324, %v334
        %v337 = vlaneseq
        %v338 = vshrl.u32 %v337, 7
        %s339 = smul.u32 %s23, 9
        %s340 = smul.u32 %s24, 8
        %s341 = sadd.s32 %s339, %s340
        %v342 = vstv %s341
        %v343 = vadd.s32 %v342, %v338
        %v344 = vadd.s32 %v343, 1
        %v345 = vlaneseq
        %v346 = vand.u32 %v345, 127
        %vm347 = vcmp.eq.s32.totalorder %v346, %v344
        %v348 = vld [vmem:[%s257] sm:$0x1]
        %vm349 = vnez %v348
        %vm350 = vmxor %vm347, 1
        %v351 = vsel %vm349, 16843009, 0
        %v352 = vunpack.c.0.s8 %v351
        %vm353 = vcmp.ne.s32.totalorder %v352, 0
        %v354 = vsel %vm353, 1, 0
        %v355 = vlaneseq
        %v356 = vshrl.u32 %v355, 7
        %v357 = vsub.s32 0, %v356
        %v358 = vrot.slane %v354, %v357
        %vm359 = vcmp.eq.s32.totalorder %v358, 1
        %vm360 = vmand %vm359, %vm350
        %v361 = vsel %vm360, -10000.0, %v336
        %362 = vmax.xlane.f32.xlu0 %v361
        %v363 = vpop.xlane.xlu0 %362
        %v364 = vsub.f32 %v361, %v363
        %v365 = vmul.f32 %v364, 1.442695
        %v366 = vpow.pop %v365
        %367 = vadd.xlane.f32.xlu0 %v366
        %v368 = vpop.xlane.xlu0 %367
        %v369 = vlog2.pop %v368
        %v370 = vmul.f32 %v369, 0.6931472
        %v371 = vadd.f32 %v363, %v370
        %v372 = vsel %vm347, %v361, 0.0
        %373 = vadd.xlane.f32.xlu0 %v372
        %v374 = vpop.xlane.xlu0 %373
        %v375 = vsub.f32 %v371, %v374
        %vm376 = vcmask 7168
        %377 = vst.msk [vmem:[%s264] sm:$0xff] %vm376, %v375
        %p378 = scmp.lt.s32.totalorder %s23, 1
        %s379 = scalar_select %p378, %s23, 1
        %p380 = scmp.lt.s32.totalorder %s24, 0
        %s381 = scalar_select %p380, %s24, 0
        %s382 = sadd.s32 %s381, %s379
        %s383 = smul.addr %s382, 8
        %s384 = scalar_lea.vmem %s4, %s383
        // Predicated region
        $region45: #{tpu_custom_call.1} parent=35 // pred_check
          %p385 = pneg %p147
        $region46: #{tpu_custom_call.1} parent=35 // pred_check_branch
          %387 = sbr.rel (%p385) target = $region48
        $region47: #{tpu_custom_call.1} parent=35 // pred_region
          _
        $region48: #{tpu_custom_call.1} parent=35 // pred_fallthru
          _
      $region36: #{tpu_custom_call.1} parent=5 // pred_fallthru
        _
      %p388 = scmp.le.s32.totalorder 2, %s14
      // Predicated region
      $region49: #{tpu_custom_call.1} parent=5 // pred_check
        %p389 = pneg %p388
      $region50: #{tpu_custom_call.1} parent=5 // pred_check_branch
        %391 = sbr.rel (%p389) target = $region52
      $region51: #{tpu_custom_call.1} parent=5 // pred_region
        %s392 = ssub.s32 %s14, 2
        // Predicated region
        $region53: #{tpu_custom_call.1} parent=51 // pred_check
          %p393 = pneg %p153
        $region54: #{tpu_custom_call.1} parent=51 // pred_check_branch
          %395 = sbr.rel (%p393) target = $region56
        $region55: #{tpu_custom_call.1} parent=51 // pred_region
          %p396 = scmp.lt.s32.totalorder %s25, 1
          %s397 = scalar_select %p396, %s25, 1
          %p398 = scmp.lt.s32.totalorder %s26, 0
          %s399 = scalar_select %p398, %s26, 0
          %s400 = sadd.s32 %s399, %s397
          %s401 = smul.addr %s400, 8
          %s402 = scalar_lea.vmem %s4, %s401
        $region56: #{tpu_custom_call.1} parent=51 // pred_fallthru
          _
      $region52: #{tpu_custom_call.1} parent=5 // pred_fallthru
        _
    $region6: #{tpu_custom_call.1} parent=1 // loop_footer
      %s18 = sadd.s32 1, %s14
    $region7: #{tpu_custom_call.1} parent=1 // loop_footer_branch
      %13 = sbr.rel target = $region3
    $region8: #{tpu_custom_call.1} parent=1 // loop_exit
      _
    %403 = vsyncpa [#allocation3], 1
    %s404 = scalar_lea.sflag [#allocation3], 1
    %405 = vsyncpa %s404, 1
    %406 = vsyncpa [#allocation5], 1

</llo_original>
